<compile_context>
chip_gen: v5e
topology: v5e:2x2
jax: 0.10.0
libtpu: 0.0.40
codegen_flags: <defaults>
</compile_context>

<pallas_src>
import functools

import jax
import jax.numpy as jnp
from jax.experimental import pallas as pl
from jax.experimental.pallas import tpu as pltpu

EPS = 1e-5


def _conv3x3_bn_relu(x_cp, w_t, bias, H, W, mask_l, mask_r):
    """One conv3x3(pad=1) + folded BN + ReLU, channel-major & lane-dense.

    x_cp:   (C, H*W) f32, channel-major flattened activation.
    w_t:    (Cout, 9*C) bf16, columns ordered (dy, dx, c), BN scale folded in.
    bias:   (Cout, 1) f32 folded BN bias.
    mask_l: (1, H*W) bool, True where w >= 1     (valid for dx offset -1).
    mask_r: (1, H*W) bool, True where w <= W - 2 (valid for dx offset +1).
    Returns (Cout, H*W) f32.
    """
    C, HW = x_cp.shape
    S = W + 1  # halo length on each side of the flattened image

    # 1-pixel zero halo: covers the dy = +/-1 row overrun.  Halo-only zeros,
    # the interior is the activation itself (no O(H*W*C) re-zeroing).
    halo = jnp.zeros((C, S), jnp.float32)
    slab = jnp.concatenate([halo, x_cp, halo], axis=1)     # (C, H*W + 2W + 2)

    # Transposed im2col: nine dense lane-shifted views, sublane-stacked.
    rows = []
    for dy in range(3):
        for dx in range(3):
            start = S + (dy - 1) * W + (dx - 1)
            v = slab[:, start:start + HW]
            if dx == 0:
                v = jnp.where(mask_l, v, 0.0)    # kill w==0 wrap
            elif dx == 2:
                v = jnp.where(mask_r, v, 0.0)    # kill w==W-1 wrap
            rows.append(v)
    patches = jnp.concatenate(rows, axis=0)                # (9*C, H*W)

    # Single MXU matmul per layer: (Cout, 9C) @ (9C, H*W), bf16 in / f32 acc.
    y = jnp.dot(w_t, patches.astype(jnp.bfloat16),
                preferred_element_type=jnp.float32)        # (Cout, H*W)

    # BN bias as broadcast VPU add + ReLU; Dropout2d(p=0) is the identity.
    return jnp.maximum(y + bias, 0.0)


def _conv_series_kernel(x_ref, w1_ref, b1_ref, w2_ref, b2_ref, o_ref, *, H, W):
    """Fused [conv3x3 + BN + ReLU] x 2 for a block of images, channel-major.

    x_ref:  (Bt, Cin, H*W)   flattened NCHW image block
    w1_ref: (Cmid, 9*Cin)    bf16 folded conv1 weights
    b1_ref: (Cmid, 1)        f32 folded conv1 BN bias
    w2_ref: (Cout, 9*Cmid)   bf16 folded conv2 weights
    b2_ref: (Cout, 1)        f32 folded conv2 BN bias
    o_ref:  (Bt, Cout, H*W)
    """
    Bt = x_ref.shape[0]
    HW = x_ref.shape[2]

    # W-boundary validity masks; shared by both layers and all images (hoisted).
    col = jax.lax.broadcasted_iota(jnp.int32, (1, HW), 1) % W
    mask_l = col >= 1
    mask_r = col <= W - 2

    w1 = w1_ref[...]
    b1 = b1_ref[...]
    w2 = w2_ref[...]
    b2 = b2_ref[...]

    for i in range(Bt):   # Bt is a small static block size
        y1 = _conv3x3_bn_relu(x_ref[i], w1, b1, H, W, mask_l, mask_r)
        # Intermediate activation (Cmid, H*W) never leaves VMEM/vregs.
        y2 = _conv3x3_bn_relu(y1, w2, b2, H, W, mask_l, mask_r)
        o_ref[i] = y2.astype(o_ref.dtype)


def conv_series_fused(x_flat, w1_t, b1, w2_t, b2, H, W, images_per_step=1):
    """x_flat: (B, Cin, H*W) -> (B, Cout, H*W); both layers in one pallas_call."""
    B, Cin, HW = x_flat.shape
    Cmid = w1_t.shape[0]
    Cout = w2_t.shape[0]
    Bt = images_per_step
    assert B % Bt == 0, "batch must be divisible by images_per_step"
    kernel = functools.partial(_conv_series_kernel, H=H, W=W)
    return pl.pallas_call(
        kernel,
        out_shape=jax.ShapeDtypeStruct((B, Cout, HW), x_flat.dtype),
        grid=(B // Bt,),
        in_specs=[
            pl.BlockSpec((Bt, Cin, HW), lambda b: (b, 0, 0)),
            pl.BlockSpec((Cmid, 9 * Cin), lambda b: (0, 0)),
            pl.BlockSpec((Cmid, 1), lambda b: (0, 0)),
            pl.BlockSpec((Cout, 9 * Cmid), lambda b: (0, 0)),
            pl.BlockSpec((Cout, 1), lambda b: (0, 0)),
        ],
        out_specs=pl.BlockSpec((Bt, Cout, HW), lambda b: (b, 0, 0)),
        compiler_params=pltpu.CompilerParams(
            # Batch axis parallel -> v7x's two TensorCores split the images;
            # on v5e/v6e it is just a short sequential loop.
            dimension_semantics=("parallel",)),
    )(x_flat, w1_t, b1, w2_t, b2)


def init_conv_series_params(key, c_in, c_out, kernels=(3, 3)):
    """Synthetic parameters matching Conv_series.__init__ (fresh BN statistics)."""
    filters = [c_in] + [c_out] * len(kernels)
    params = []
    for k, f1, f2 in zip(kernels, filters, filters[1:]):
        key, wk = jax.random.split(key)
        # PyTorch weight is (Cout, Cin, kH, kW); we store HWIO here.
        w = jax.random.normal(wk, (k, k, f1, f2), jnp.float32) * 0.1
        gamma = jnp.ones((f2,), jnp.float32)
        beta = jnp.zeros((f2,), jnp.float32)
        running_mean = jnp.zeros((f2,), jnp.float32)
        running_var = jnp.ones((f2,), jnp.float32)
        params.append((w, gamma, beta, running_mean, running_var))
    return params


def fold_conv_bn(w_hwio, gamma, beta, mean, var, eps=EPS):
    """Fold inference BatchNorm into channel-major conv weights + a bias.

    Returns (w_t, bias): w_t is (Cout, kH*kW*Cin) bf16 with columns ordered
    (dy, dx, ci) and the BN scale multiplied in; bias is (Cout, 1) f32.
    """
    kh, kw, cin, cout = w_hwio.shape
    scale = gamma / jnp.sqrt(var + eps)
    bias = beta - mean * scale
    w_scaled = w_hwio * scale                                # broadcast over Cout
    w_t = jnp.transpose(w_scaled, (3, 0, 1, 2)).reshape(cout, kh * kw * cin)
    return w_t.astype(jnp.bfloat16), bias.reshape(cout, 1).astype(jnp.float32)


@jax.jit
def conv_series_forward(x_nchw, w1_t, b1, w2_t, b2):
    """Matches Conv_series.forward (eval mode, dropout p=0). NCHW in / NCHW out."""
    B, Cin, H, W = x_nchw.shape
    x_flat = x_nchw.reshape(B, Cin, H * W)                   # free reshape
    y = conv_series_fused(x_flat, w1_t, b1, w2_t, b2, H, W, images_per_step=1)
    return y.reshape(B, w2_t.shape[0], H, W)                 # free reshape


def reference_forward(x_nchw, params, eps=EPS):
    """Pure-JAX f32 reference (lax conv) for a correctness check."""
    x = jnp.transpose(x_nchw, (0, 2, 3, 1))
    for (w, gamma, beta, mean, var) in params:
        y = jax.lax.conv_general_dilated(
            x, w, window_strides=(1, 1), padding="SAME",
            dimension_numbers=("NHWC", "HWIO", "NHWC"))
        scale = gamma / jnp.sqrt(var + eps)
        bias = beta - mean * scale
        x = jnp.maximum(y * scale + bias, 0.0)
    return jnp.transpose(x, (0, 3, 1, 2))


if __name__ == "__main__":
    key = jax.random.PRNGKey(0)
    kx, kp = jax.random.split(key)

    B, C_IN, C_OUT, H, W = 2, 4, 8, 16, 16
    x = jax.random.normal(kx, (B, C_IN, H, W), jnp.float32)   # NCHW like PyTorch
    params = init_conv_series_params(kp, C_IN, C_OUT, kernels=(3, 3))
    (w1_t, b1), (w2_t, b2) = [fold_conv_bn(*p) for p in params]

    out = conv_series_forward(x, w1_t, b1, w2_t, b2)
    out = jax.block_until_ready(out)

    ref = reference_forward(x, params)
    assert out.shape == (B, C_OUT, H, W)
    max_err = float(jnp.max(jnp.abs(out - ref)))
    # bf16 MXU operands (f32 accumulation) -> tolerance looser than pure f32.
    assert jnp.allclose(out, ref, atol=5e-2, rtol=5e-2), max_err

    print("KERNEL_OK")
</pallas_src>

<mosaic_0001>
module attributes {stable_mosaic.version = 11 : i64} {
  func.func @_conv_series_kernel(%arg0: i32, %arg1: memref<1x4x256xf32, #tpu.memory_space<vmem>>, %arg2: memref<8x36xbf16, #tpu.memory_space<vmem>>, %arg3: memref<8x1xf32, #tpu.memory_space<vmem>>, %arg4: memref<8x72xbf16, #tpu.memory_space<vmem>>, %arg5: memref<8x1xf32, #tpu.memory_space<vmem>>, %arg6: memref<1x8x256xf32, #tpu.memory_space<vmem>>) attributes {dimension_semantics = [#tpu.dimension_semantics<parallel>], iteration_bounds = array<i64: 2>, scalar_prefetch = 0 : i64, scratch_operands = 0 : i64, tpu.core_type = #tpu.core_type<tc>, window_params = [{transform_indices = @transform_0, window_bounds = array<i64: 1, 4, 256>}, {pipeline_mode = #tpu.pipeline_mode<synchronous>, transform_indices = @transform_1, window_bounds = array<i64: 8, 36>}, {pipeline_mode = #tpu.pipeline_mode<synchronous>, transform_indices = @transform_2, window_bounds = array<i64: 8, 1>}, {pipeline_mode = #tpu.pipeline_mode<synchronous>, transform_indices = @transform_3, window_bounds = array<i64: 8, 72>}, {pipeline_mode = #tpu.pipeline_mode<synchronous>, transform_indices = @transform_4, window_bounds = array<i64: 8, 1>}, {transform_indices = @transform_5, window_bounds = array<i64: 1, 8, 256>}]} {
    %0 = tpu.iota {dimensions = array<i32: 1>} : vector<1x256xi32>
    %c16_i32 = arith.constant 16 : i32
    %c0_i32 = arith.constant 0 : i32
    %1 = arith.cmpi eq, %c16_i32, %c0_i32 : i32
    %c1_i32 = arith.constant 1 : i32
    %2 = arith.select %1, %c1_i32, %c16_i32 : i32
    %3 = vector.broadcast %2 : i32 to vector<1x256xi32>
    %4 = arith.remsi %0, %3 : vector<1x256xi32>
    %c0_i32_0 = arith.constant 0 : i32
    %5 = vector.broadcast %c0_i32_0 : i32 to vector<1x256xi32>
    %6 = arith.cmpi ne, %4, %5 : vector<1x256xi32>
    %c0_i32_1 = arith.constant 0 : i32
    %7 = vector.broadcast %c0_i32_1 : i32 to vector<1x256xi32>
    %8 = arith.cmpi slt, %4, %7 : vector<1x256xi32>
    %c0_i32_2 = arith.constant 0 : i32
    %9 = arith.cmpi slt, %2, %c0_i32_2 : i32
    %10 = vector.broadcast %9 : i1 to vector<1x256xi1>
    %11 = vector.broadcast %10 : vector<1x256xi1> to vector<1x256xi1>
    %12 = arith.xori %8, %11 : vector<1x256xi1>
    %13 = arith.andi %12, %6 : vector<1x256xi1>
    %14 = vector.broadcast %2 : i32 to vector<1x256xi32>
    %15 = arith.addi %4, %14 : vector<1x256xi32>
    %16 = arith.select %13, %15, %4 : vector<1x256xi1>, vector<1x256xi32>
    %c1_i32_3 = arith.constant 1 : i32
    %17 = vector.broadcast %c1_i32_3 : i32 to vector<1x256xi32>
    %18 = arith.cmpi sge, %16, %17 : vector<1x256xi32>
    %c14_i32 = arith.constant 14 : i32
    %19 = vector.broadcast %c14_i32 : i32 to vector<1x256xi32>
    %20 = arith.cmpi sle, %16, %19 : vector<1x256xi32>
    %c0 = arith.constant 0 : index
    %c0_4 = arith.constant 0 : index
    %21 = vector.load %arg2[%c0, %c0_4] : memref<8x36xbf16, #tpu.memory_space<vmem>>, vector<8x36xbf16>
    %c0_5 = arith.constant 0 : index
    %c0_6 = arith.constant 0 : index
    %22 = vector.load %arg3[%c0_5, %c0_6] : memref<8x1xf32, #tpu.memory_space<vmem>>, vector<8x1xf32>
    %c0_7 = arith.constant 0 : index
    %c0_8 = arith.constant 0 : index
    %23 = vector.load %arg4[%c0_7, %c0_8] : memref<8x72xbf16, #tpu.memory_space<vmem>>, vector<8x72xbf16>
    %c0_9 = arith.constant 0 : index
    %c0_10 = arith.constant 0 : index
    %24 = vector.load %arg5[%c0_9, %c0_10] : memref<8x1xf32, #tpu.memory_space<vmem>>, vector<8x1xf32>
    %c0_11 = arith.constant 0 : index
    %c0_12 = arith.constant 0 : index
    %c0_13 = arith.constant 0 : index
    %25 = vector.load %arg1[%c0_11, %c0_12, %c0_13] : memref<1x4x256xf32, #tpu.memory_space<vmem>>, vector<1x4x256xf32>
    %26 = vector.shape_cast %25 : vector<1x4x256xf32> to vector<4x256xf32>
    %cst = arith.constant 0.000000e+00 : f32
    %27 = vector.broadcast %cst : f32 to vector<4x17xf32>
    %28 = tpu.concatenate %27, %26, %27 in 1 : vector<4x17xf32>, vector<4x256xf32>, vector<4x17xf32> -> vector<4x290xf32>
    %29 = vector.extract_strided_slice %28 {offsets = [0, 0], sizes = [4, 256], strides = [1, 1]} : vector<4x290xf32> to vector<4x256xf32>
    %cst_14 = arith.constant 0.000000e+00 : f32
    %30 = vector.shape_cast %18 : vector<1x256xi1> to vector<1x256xi1>
    %31 = vector.broadcast %30 : vector<1x256xi1> to vector<4x256xi1>
    %32 = vector.broadcast %cst_14 : f32 to vector<4x256xf32>
    %33 = arith.select %31, %29, %32 : vector<4x256xi1>, vector<4x256xf32>
    %34 = vector.extract_strided_slice %28 {offsets = [0, 1], sizes = [4, 256], strides = [1, 1]} : vector<4x290xf32> to vector<4x256xf32>
    %35 = vector.extract_strided_slice %28 {offsets = [0, 2], sizes = [4, 256], strides = [1, 1]} : vector<4x290xf32> to vector<4x256xf32>
    %cst_15 = arith.constant 0.000000e+00 : f32
    %36 = vector.shape_cast %20 : vector<1x256xi1> to vector<1x256xi1>
    %37 = vector.broadcast %36 : vector<1x256xi1> to vector<4x256xi1>
    %38 = vector.broadcast %cst_15 : f32 to vector<4x256xf32>
    %39 = arith.select %37, %35, %38 : vector<4x256xi1>, vector<4x256xf32>
    %40 = vector.extract_strided_slice %28 {offsets = [0, 16], sizes = [4, 256], strides = [1, 1]} : vector<4x290xf32> to vector<4x256xf32>
    %cst_16 = arith.constant 0.000000e+00 : f32
    %41 = vector.shape_cast %18 : vector<1x256xi1> to vector<1x256xi1>
    %42 = vector.broadcast %41 : vector<1x256xi1> to vector<4x256xi1>
    %43 = vector.broadcast %cst_16 : f32 to vector<4x256xf32>
    %44 = arith.select %42, %40, %43 : vector<4x256xi1>, vector<4x256xf32>
    %45 = vector.extract_strided_slice %28 {offsets = [0, 17], sizes = [4, 256], strides = [1, 1]} : vector<4x290xf32> to vector<4x256xf32>
    %46 = vector.extract_strided_slice %28 {offsets = [0, 18], sizes = [4, 256], strides = [1, 1]} : vector<4x290xf32> to vector<4x256xf32>
    %cst_17 = arith.constant 0.000000e+00 : f32
    %47 = vector.shape_cast %20 : vector<1x256xi1> to vector<1x256xi1>
    %48 = vector.broadcast %47 : vector<1x256xi1> to vector<4x256xi1>
    %49 = vector.broadcast %cst_17 : f32 to vector<4x256xf32>
    %50 = arith.select %48, %46, %49 : vector<4x256xi1>, vector<4x256xf32>
    %51 = vector.extract_strided_slice %28 {offsets = [0, 32], sizes = [4, 256], strides = [1, 1]} : vector<4x290xf32> to vector<4x256xf32>
    %cst_18 = arith.constant 0.000000e+00 : f32
    %52 = vector.shape_cast %18 : vector<1x256xi1> to vector<1x256xi1>
    %53 = vector.broadcast %52 : vector<1x256xi1> to vector<4x256xi1>
    %54 = vector.broadcast %cst_18 : f32 to vector<4x256xf32>
    %55 = arith.select %53, %51, %54 : vector<4x256xi1>, vector<4x256xf32>
    %56 = vector.extract_strided_slice %28 {offsets = [0, 33], sizes = [4, 256], strides = [1, 1]} : vector<4x290xf32> to vector<4x256xf32>
    %57 = vector.extract_strided_slice %28 {offsets = [0, 34], sizes = [4, 256], strides = [1, 1]} : vector<4x290xf32> to vector<4x256xf32>
    %cst_19 = arith.constant 0.000000e+00 : f32
    %58 = vector.shape_cast %20 : vector<1x256xi1> to vector<1x256xi1>
    %59 = vector.broadcast %58 : vector<1x256xi1> to vector<4x256xi1>
    %60 = vector.broadcast %cst_19 : f32 to vector<4x256xf32>
    %61 = arith.select %59, %57, %60 : vector<4x256xi1>, vector<4x256xf32>
    %62 = tpu.concatenate %33, %34, %39, %44, %45, %50, %55, %56, %61 in 0 : vector<4x256xf32>, vector<4x256xf32>, vector<4x256xf32>, vector<4x256xf32>, vector<4x256xf32>, vector<4x256xf32>, vector<4x256xf32>, vector<4x256xf32>, vector<4x256xf32> -> vector<36x256xf32>
    %63 = arith.truncf %62 : vector<36x256xf32> to vector<36x256xbf16>
    %cst_20 = arith.constant dense<0.000000e+00> : vector<8x256xf32>
    %64 = tpu.matmul %21, %63, %cst_20 {dimension_numbers = #tpu.dot_dimension_numbers<[1], [0], [0], [1], [0, 0, 1, 1], [], []>} : vector<8x36xbf16>, vector<36x256xbf16>, vector<8x256xf32> -> vector<8x256xf32>
    %65 = vector.broadcast %22 : vector<8x1xf32> to vector<8x256xf32>
    %66 = arith.addf %64, %65 : vector<8x256xf32>
    %cst_21 = arith.constant 0.000000e+00 : f32
    %67 = vector.broadcast %cst_21 : f32 to vector<8x256xf32>
    %68 = arith.maximumf %66, %67 : vector<8x256xf32>
    %cst_22 = arith.constant 0.000000e+00 : f32
    %69 = vector.broadcast %cst_22 : f32 to vector<8x17xf32>
    %70 = tpu.concatenate %69, %68, %69 in 1 : vector<8x17xf32>, vector<8x256xf32>, vector<8x17xf32> -> vector<8x290xf32>
    %71 = vector.extract_strided_slice %70 {offsets = [0, 0], sizes = [8, 256], strides = [1, 1]} : vector<8x290xf32> to vector<8x256xf32>
    %cst_23 = arith.constant 0.000000e+00 : f32
    %72 = vector.shape_cast %18 : vector<1x256xi1> to vector<1x256xi1>
    %73 = vector.broadcast %72 : vector<1x256xi1> to vector<8x256xi1>
    %74 = vector.broadcast %cst_23 : f32 to vector<8x256xf32>
    %75 = arith.select %73, %71, %74 : vector<8x256xi1>, vector<8x256xf32>
    %76 = vector.extract_strided_slice %70 {offsets = [0, 1], sizes = [8, 256], strides = [1, 1]} : vector<8x290xf32> to vector<8x256xf32>
    %77 = vector.extract_strided_slice %70 {offsets = [0, 2], sizes = [8, 256], strides = [1, 1]} : vector<8x290xf32> to vector<8x256xf32>
    %cst_24 = arith.constant 0.000000e+00 : f32
    %78 = vector.shape_cast %20 : vector<1x256xi1> to vector<1x256xi1>
    %79 = vector.broadcast %78 : vector<1x256xi1> to vector<8x256xi1>
    %80 = vector.broadcast %cst_24 : f32 to vector<8x256xf32>
    %81 = arith.select %79, %77, %80 : vector<8x256xi1>, vector<8x256xf32>
    %82 = vector.extract_strided_slice %70 {offsets = [0, 16], sizes = [8, 256], strides = [1, 1]} : vector<8x290xf32> to vector<8x256xf32>
    %cst_25 = arith.constant 0.000000e+00 : f32
    %83 = vector.shape_cast %18 : vector<1x256xi1> to vector<1x256xi1>
    %84 = vector.broadcast %83 : vector<1x256xi1> to vector<8x256xi1>
    %85 = vector.broadcast %cst_25 : f32 to vector<8x256xf32>
    %86 = arith.select %84, %82, %85 : vector<8x256xi1>, vector<8x256xf32>
    %87 = vector.extract_strided_slice %70 {offsets = [0, 17], sizes = [8, 256], strides = [1, 1]} : vector<8x290xf32> to vector<8x256xf32>
    %88 = vector.extract_strided_slice %70 {offsets = [0, 18], sizes = [8, 256], strides = [1, 1]} : vector<8x290xf32> to vector<8x256xf32>
    %cst_26 = arith.constant 0.000000e+00 : f32
    %89 = vector.shape_cast %20 : vector<1x256xi1> to vector<1x256xi1>
    %90 = vector.broadcast %89 : vector<1x256xi1> to vector<8x256xi1>
    %91 = vector.broadcast %cst_26 : f32 to vector<8x256xf32>
    %92 = arith.select %90, %88, %91 : vector<8x256xi1>, vector<8x256xf32>
    %93 = vector.extract_strided_slice %70 {offsets = [0, 32], sizes = [8, 256], strides = [1, 1]} : vector<8x290xf32> to vector<8x256xf32>
    %cst_27 = arith.constant 0.000000e+00 : f32
    %94 = vector.shape_cast %18 : vector<1x256xi1> to vector<1x256xi1>
    %95 = vector.broadcast %94 : vector<1x256xi1> to vector<8x256xi1>
    %96 = vector.broadcast %cst_27 : f32 to vector<8x256xf32>
    %97 = arith.select %95, %93, %96 : vector<8x256xi1>, vector<8x256xf32>
    %98 = vector.extract_strided_slice %70 {offsets = [0, 33], sizes = [8, 256], strides = [1, 1]} : vector<8x290xf32> to vector<8x256xf32>
    %99 = vector.extract_strided_slice %70 {offsets = [0, 34], sizes = [8, 256], strides = [1, 1]} : vector<8x290xf32> to vector<8x256xf32>
    %cst_28 = arith.constant 0.000000e+00 : f32
    %100 = vector.shape_cast %20 : vector<1x256xi1> to vector<1x256xi1>
    %101 = vector.broadcast %100 : vector<1x256xi1> to vector<8x256xi1>
    %102 = vector.broadcast %cst_28 : f32 to vector<8x256xf32>
    %103 = arith.select %101, %99, %102 : vector<8x256xi1>, vector<8x256xf32>
    %104 = tpu.concatenate %75, %76, %81, %86, %87, %92, %97, %98, %103 in 0 : vector<8x256xf32>, vector<8x256xf32>, vector<8x256xf32>, vector<8x256xf32>, vector<8x256xf32>, vector<8x256xf32>, vector<8x256xf32>, vector<8x256xf32>, vector<8x256xf32> -> vector<72x256xf32>
    %105 = arith.truncf %104 : vector<72x256xf32> to vector<72x256xbf16>
    %cst_29 = arith.constant dense<0.000000e+00> : vector<8x256xf32>
    %106 = tpu.matmul %23, %105, %cst_29 {dimension_numbers = #tpu.dot_dimension_numbers<[1], [0], [0], [1], [0, 0, 1, 1], [], []>} : vector<8x72xbf16>, vector<72x256xbf16>, vector<8x256xf32> -> vector<8x256xf32>
    %107 = vector.broadcast %24 : vector<8x1xf32> to vector<8x256xf32>
    %108 = arith.addf %106, %107 : vector<8x256xf32>
    %cst_30 = arith.constant 0.000000e+00 : f32
    %109 = vector.broadcast %cst_30 : f32 to vector<8x256xf32>
    %110 = arith.maximumf %108, %109 : vector<8x256xf32>
    %c0_31 = arith.constant 0 : index
    %c0_32 = arith.constant 0 : index
    %c0_33 = arith.constant 0 : index
    %111 = vector.load %arg6[%c0_31, %c0_32, %c0_33] : memref<1x8x256xf32, #tpu.memory_space<vmem>>, vector<1x8x256xf32>
    %112 = vector.shape_cast %111 : vector<1x8x256xf32> to vector<8x256xf32>
    %113 = vector.shape_cast %110 : vector<8x256xf32> to vector<1x8x256xf32>
    tpu.vector_store %arg6[%c0_31, %c0_32, %c0_33], %113 {strides = array<i32>} : memref<1x8x256xf32, #tpu.memory_space<vmem>>, vector<1x8x256xf32>,
    return
  }
  func.func @transform_0(%arg0: i32) -> (i32, i32, i32) {
    %c0_i32 = arith.constant 0 : i32
    %c0_i32_0 = arith.constant 0 : i32
    %c0_i32_1 = arith.constant 0 : i32
    return %arg0, %c0_i32, %c0_i32_0 : i32, i32, i32
  }
  func.func @transform_1(%arg0: i32) -> (i32, i32) {
    %c0_i32 = arith.constant 0 : i32
    %c0_i32_0 = arith.constant 0 : i32
    %c0_i32_1 = arith.constant 0 : i32
    return %c0_i32, %c0_i32_0 : i32, i32
  }
  func.func @transform_2(%arg0: i32) -> (i32, i32) {
    %c0_i32 = arith.constant 0 : i32
    %c0_i32_0 = arith.constant 0 : i32
    %c0_i32_1 = arith.constant 0 : i32
    return %c0_i32, %c0_i32_0 : i32, i32
  }
  func.func @transform_3(%arg0: i32) -> (i32, i32) {
    %c0_i32 = arith.constant 0 : i32
    %c0_i32_0 = arith.constant 0 : i32
    %c0_i32_1 = arith.constant 0 : i32
    return %c0_i32, %c0_i32_0 : i32, i32
  }
  func.func @transform_4(%arg0: i32) -> (i32, i32) {
    %c0_i32 = arith.constant 0 : i32
    %c0_i32_0 = arith.constant 0 : i32
    %c0_i32_1 = arith.constant 0 : i32
    return %c0_i32, %c0_i32_0 : i32, i32
  }
  func.func @transform_5(%arg0: i32) -> (i32, i32, i32) {
    %c0_i32 = arith.constant 0 : i32
    %c0_i32_0 = arith.constant 0 : i32
    %c0_i32_1 = arith.constant 0 : i32
    return %arg0, %c0_i32, %c0_i32_0 : i32, i32, i32
  }
}

</mosaic_0001>

<llo_original>
// kernel: conv_series_forward.1
$region0: #{conv_series_forward.1}
  #allocation0 [shape = 'u32[]', space=smem, size = 0x4, offset = 0x4, fixed_abs, tag = 'smem constant byte address 0x4 - core index']
  #allocation1 [shape = 'u32[72,128]{1,0:T(1,128)}', space=vmem, size = 0x9000, scoped, tag = 'internal scratch']
  %s0 = inlined_call_operand.vmem [shape: f32[2,4,256], index: 0, kind: input, shape index: {}]
  %s1 = inlined_call_operand.vmem [shape: bf16[8,36], index: 1, kind: input, shape index: {}]
  %s2 = inlined_call_operand.vmem [shape: f32[8,1], index: 2, kind: input, shape index: {}]
  %s3 = inlined_call_operand.vmem [shape: bf16[8,72], index: 3, kind: input, shape index: {}]
  %s4 = inlined_call_operand.vmem [shape: f32[8,1], index: 4, kind: input, shape index: {}]
  %s5 = inlined_call_operand.vmem [shape: f32[2,8,256], index: 5, kind: output, shape index: {}]
  %s6 = sld [smem:[#allocation0]]
  $region53: #{conv_series_forward.1} parent=0
    _
  %s8 = ssub.s32 1, %s6
  %s9 = scalar_select 0, %s8, %s6
  loop: start=0, step=1, limit=4
  $region2: #{conv_series_forward.1} parent=0 // loop_pre_header
    _
  $region3: #{conv_series_forward.1} parent=0 // loop_header
    %s11 = sphi 0, %s15
    %p12 = scmp.ge.s32.totalorder %s11, 4
    %s21 = sphi 0, %s23
    %s24 = sphi 0, %s21
    %s25 = sphi 0, %s24
    %s41 = sphi 0, %s25
    %s45 = sphi 0, %s45
    %s47 = sphi 0, %s45
    %s48 = sphi 0, %s47
    %s62 = sphi 0, %s48
    %s66 = sphi 0, %s66
    %s68 = sphi 0, %s66
    %s69 = sphi 0, %s68
    %s83 = sphi 0, %s69
    %s87 = sphi 0, %s87
    %s89 = sphi 0, %s87
    %s90 = sphi 0, %s89
    %s104 = sphi 0, %s90
    %s108 = sphi 0, %s108
    %s110 = sphi 0, %s108
    %s111 = sphi 0, %s110
    %s125 = sphi 0, %s111
    %s131 = sphi 0, %s133
    %s134 = sphi 0, %s131
    %s135 = sphi 0, %s134
    %s151 = sphi 0, %s135
  $region4: #{conv_series_forward.1} parent=0 // loop_header_branch
    %14 = sbr.rel (%p12) target = $region8
  $region5: #{conv_series_forward.1} parent=0 // loop_body
    %s16 = ssub.s32 %s11, 1
    %s17 = ssub.s32 %s11, 2
    %s18 = sadd.s32 %s11, 1
    %s19 = ssub.s32 %s11, %s18
    %p20 = scmp.eq.s32.totalorder %s19, 0
    %s22 = sadd.s32 %s21, 1
    %s23 = scalar_select %p20, %s21, %s22
    %p26 = pneg %p20
    %p27 = scmp.eq.s32.totalorder %s11, 1
    %p28 = por %p26, %p27
    %p29 = scmp.ne.s32.totalorder %s21, %s24
    %p30 = scmp.eq.s32.totalorder %s11, 0
    %p31 = por %p29, %p30
    %p32 = scmp.ne.s32.totalorder %s21, %s24
    %p33 = scmp.eq.s32.totalorder %s16, 1
    %p34 = por %p32, %p33
    %p35 = scmp.ne.s32.totalorder %s24, %s25
    %p36 = scmp.eq.s32.totalorder %s16, 0
    %p37 = por %p35, %p36
    %p38 = scmp.ne.s32.totalorder %s24, %s25
    %p39 = scmp.eq.s32.totalorder %s17, 1
    %p40 = por %p38, %p39
    %p42 = scmp.ne.s32.totalorder %s25, %s41
    %p43 = scmp.eq.s32.totalorder %s17, 0
    %p44 = por %p42, %p43
    %s46 = sadd.s32 %s45, 1
    %p49 = scmp.eq.s32.totalorder %s11, 1
    %p50 = scmp.ne.s32.totalorder %s45, %s47
    %p51 = scmp.eq.s32.totalorder %s11, 0
    %p52 = por %p50, %p51
    %p53 = scmp.ne.s32.totalorder %s45, %s47
    %p54 = scmp.eq.s32.totalorder %s16, 1
    %p55 = por %p53, %p54
    %p56 = scmp.ne.s32.totalorder %s47, %s48
    %p57 = scmp.eq.s32.totalorder %s16, 0
    %p58 = por %p56, %p57
    %p59 = scmp.ne.s32.totalorder %s47, %s48
    %p60 = scmp.eq.s32.totalorder %s17, 1
    %p61 = por %p59, %p60
    %p63 = scmp.ne.s32.totalorder %s48, %s62
    %p64 = scmp.eq.s32.totalorder %s17, 0
    %p65 = por %p63, %p64
    %s67 = sadd.s32 %s66, 1
    %p70 = scmp.eq.s32.totalorder %s11, 1
    %p71 = scmp.ne.s32.totalorder %s66, %s68
    %p72 = scmp.eq.s32.totalorder %s11, 0
    %p73 = por %p71, %p72
    %p74 = scmp.ne.s32.totalorder %s66, %s68
    %p75 = scmp.eq.s32.totalorder %s16, 1
    %p76 = por %p74, %p75
    %p77 = scmp.ne.s32.totalorder %s68, %s69
    %p78 = scmp.eq.s32.totalorder %s16, 0
    %p79 = por %p77, %p78
    %p80 = scmp.ne.s32.totalorder %s68, %s69
    %p81 = scmp.eq.s32.totalorder %s17, 1
    %p82 = por %p80, %p81
    %p84 = scmp.ne.s32.totalorder %s69, %s83
    %p85 = scmp.eq.s32.totalorder %s17, 0
    %p86 = por %p84, %p85
    %s88 = sadd.s32 %s87, 1
    %p91 = scmp.eq.s32.totalorder %s11, 1
    %p92 = scmp.ne.s32.totalorder %s87, %s89
    %p93 = scmp.eq.s32.totalorder %s11, 0
    %p94 = por %p92, %p93
    %p95 = scmp.ne.s32.totalorder %s87, %s89
    %p96 = scmp.eq.s32.totalorder %s16, 1
    %p97 = por %p95, %p96
    %p98 = scmp.ne.s32.totalorder %s89, %s90
    %p99 = scmp.eq.s32.totalorder %s16, 0
    %p100 = por %p98, %p99
    %p101 = scmp.ne.s32.totalorder %s89, %s90
    %p102 = scmp.eq.s32.totalorder %s17, 1
    %p103 = por %p101, %p102
    %p105 = scmp.ne.s32.totalorder %s90, %s104
    %p106 = scmp.eq.s32.totalorder %s17, 0
    %p107 = por %p105, %p106
    %s109 = sadd.s32 %s108, 1
    %p112 = scmp.eq.s32.totalorder %s11, 1
    %p113 = scmp.ne.s32.totalorder %s108, %s110
    %p114 = scmp.eq.s32.totalorder %s11, 0
    %p115 = por %p113, %p114
    %p116 = scmp.ne.s32.totalorder %s108, %s110
    %p117 = scmp.eq.s32.totalorder %s16, 1
    %p118 = por %p116, %p117
    %p119 = scmp.ne.s32.totalorder %s110, %s111
    %p120 = scmp.eq.s32.totalorder %s16, 0
    %p121 = por %p119, %p120
    %p122 = scmp.ne.s32.totalorder %s110, %s111
    %p123 = scmp.eq.s32.totalorder %s17, 1
    %p124 = por %p122, %p123
    %p126 = scmp.ne.s32.totalorder %s111, %s125
    %p127 = scmp.eq.s32.totalorder %s17, 0
    %p128 = por %p126, %p127
    %s129 = ssub.s32 %s11, %s18
    %p130 = scmp.eq.s32.totalorder %s129, 0
    %s132 = sadd.s32 %s131, 1
    %s133 = scalar_select %p130, %s131, %s132
    %p136 = pneg %p130
    %p137 = scmp.eq.s32.totalorder %s11, 1
    %p138 = por %p136, %p137
    %p139 = scmp.ne.s32.totalorder %s131, %s134
    %p140 = scmp.eq.s32.totalorder %s11, 0
    %p141 = por %p139, %p140
    %p142 = scmp.ne.s32.totalorder %s131, %s134
    %p143 = scmp.eq.s32.totalorder %s16, 1
    %p144 = por %p142, %p143
    %p145 = scmp.ne.s32.totalorder %s134, %s135
    %p146 = scmp.eq.s32.totalorder %s16, 0
    %p147 = por %p145, %p146
    %p148 = scmp.ne.s32.totalorder %s134, %s135
    %p149 = scmp.eq.s32.totalorder %s17, 1
    %p150 = por %p148, %p149
    %p152 = scmp.ne.s32.totalorder %s135, %s151
    %p153 = scmp.eq.s32.totalorder %s17, 0
    %p154 = por %p152, %p153
    %p155 = scmp.le.s32.totalorder 1, %s11
    %p156 = scmp.lt.s32.totalorder %s11, 3
    %p157 = pnand %p155, %p156
    %p158 = pneg %p157
    // Predicated region
    $region9: #{conv_series_forward.1} parent=5 // pred_check
      _
    $region10: #{conv_series_forward.1} parent=5 // pred_check_branch
      %160 = sbr.rel (%p157) target = $region12
    $region11: #{conv_series_forward.1} parent=5 // pred_region
      %s161 = ssub.s32 %s11, 1
      // Predicated region
      $region13: #{conv_series_forward.1} parent=11 // pred_check
        %p162 = pneg %p58
      $region14: #{conv_series_forward.1} parent=11 // pred_check_branch
        %164 = sbr.rel (%p162) target = $region16
      $region15: #{conv_series_forward.1} parent=11 // pred_region
        _
      $region16: #{conv_series_forward.1} parent=11 // pred_fallthru
        _
      // Predicated region
      $region17: #{conv_series_forward.1} parent=11 // pred_check
        %p165 = pneg %p79
      $region18: #{conv_series_forward.1} parent=11 // pred_check_branch
        %167 = sbr.rel (%p165) target = $region20
      $region19: #{conv_series_forward.1} parent=11 // pred_region
        _
      $region20: #{conv_series_forward.1} parent=11 // pred_fallthru
        _
      // Predicated region
      $region21: #{conv_series_forward.1} parent=11 // pred_check
        %p168 = pneg %p100
      $region22: #{conv_series_forward.1} parent=11 // pred_check_branch
        %170 = sbr.rel (%p168) target = $region24
      $region23: #{conv_series_forward.1} parent=11 // pred_region
        _
      $region24: #{conv_series_forward.1} parent=11 // pred_fallthru
        _
      // Predicated region
      $region25: #{conv_series_forward.1} parent=11 // pred_check
        %p171 = pneg %p121
      $region26: #{conv_series_forward.1} parent=11 // pred_check_branch
        %173 = sbr.rel (%p171) target = $region28
      $region27: #{conv_series_forward.1} parent=11 // pred_region
        _
      $region28: #{conv_series_forward.1} parent=11 // pred_fallthru
        _
    $region12: #{conv_series_forward.1} parent=5 // pred_fallthru
      _
    %p174 = scmp.lt.s32.totalorder %s11, 2
    // Predicated region
    $region29: #{conv_series_forward.1} parent=5 // pred_check
      %p175 = pneg %p174
    $region30: #{conv_series_forward.1} parent=5 // pred_check_branch
      %177 = sbr.rel (%p175) target = $region32
    $region31: #{conv_series_forward.1} parent=5 // pred_region
      // Predicated region
      $region33: #{conv_series_forward.1} parent=31 // pred_check
        %p178 = pneg %p31
      $region34: #{conv_series_forward.1} parent=31 // pred_check_branch
        %180 = sbr.rel (%p178) target = $region36
      $region35: #{conv_series_forward.1} parent=31 // pred_region
        %p181 = scmp.lt.s32.totalorder %s11, 1
        %s182 = scalar_select %p181, %s11, 1
        %s183 = smul.addr %s182, 2
        %s184 = smul.addr %s183, 4
        %s185 = scalar_lea.vmem %s0, %s184
      $region36: #{conv_series_forward.1} parent=31 // pred_fallthru
        _
    $region32: #{conv_series_forward.1} parent=5 // pred_fallthru
      _
    %p186 = scmp.le.s32.totalorder 1, %s11
    %p187 = scmp.lt.s32.totalorder %s11, 3
    %p188 = pnand %p186, %p187
    %p189 = pneg %p188
    // Predicated region
    $region37: #{conv_series_forward.1} parent=5 // pred_check
      _
    $region38: #{conv_series_forward.1} parent=5 // pred_check_branch
      %191 = sbr.rel (%p188) target = $region40
    $region39: #{conv_series_forward.1} parent=5 // pred_region
      %s192 = ssub.s32 %s11, 1
      %p193 = scmp.lt.s32.totalorder %s16, 1
      %s194 = scalar_select %p193, %s16, 1
      %s195 = smul.addr %s194, 2
      %s196 = smul.addr %s195, 4
      %s197 = scalar_lea.vmem %s0, %s196
      %p198 = pneg %p37
      %p199 = pneg %p34
      %p200 = pneg %p58
      %p201 = pneg %p55
      %p202 = pneg %p79
      %p203 = pneg %p76
      %p204 = pneg %p100
      %p205 = pneg %p97
      %p206 = pneg %p121
      %p207 = pneg %p118
      %p208 = pneg %p147
      %p209 = pneg %p144
      %p210 = scmp.lt.s32.totalorder %s16, 1
      %s211 = scalar_select %p210, %s16, 1
      %s212 = smul.addr %s211, 2
      %s213 = smul.addr %s212, 8
      %s214 = scalar_lea.vmem %s5, %s213
      %p215 = scmp.lt.s32.totalorder %s16, 1
      %s216 = scalar_select %p215, %s16, 1
      %s217 = smul.addr %s216, 2
      %s218 = smul.addr %s217, 4
      %s219 = scalar_lea.vmem %s0, %s218
      %p220 = scmp.lt.s32.totalorder %s16, 1
      %s221 = scalar_select %p220, %s16, 1
      %s222 = smul.addr %s221, 2
      %s223 = smul.addr %s222, 8
      %s224 = scalar_lea.vmem %s5, %s223
      %v226 = vlaneseq
      %v227 = vand.u32 %v226, 127
      %v228 = vadd.s32 %v227, 128
      %vm229 = vcmp.lt.s32.totalorder %v227, 0
      %v230 = vsub.s32 0, %v227
      %v231 = vsel %vm229, %v230, %v227
      %v232 = vshrl.u32 %v231, 4
      %v233 = vand.u32 %v231, 15
      %v234 = vsub.s32 0, %v233
      %v235 = vsel %vm229, %v234, %v233
      %vm236 = vcmp.lt.s32.totalorder %v228, 0
      %v237 = vsub.s32 0, %v228
      %v238 = vsel %vm236, %v237, %v228
      %v239 = vshrl.u32 %v238, 4
      %v240 = vand.u32 %v238, 15
      %v241 = vsub.s32 0, %v240
      %v242 = vsel %vm236, %v241, %v240
      %vm243 = vcmp.ne.s32.totalorder %v235, 0
      %vm244 = vcmp.ne.s32.totalorder %v242, 0
      %vm245 = vcmp.lt.s32.totalorder %v235, 0
      %vm246 = vcmp.lt.s32.totalorder %v242, 0
      %vm247 = vmand %vm245, %vm243
      %vm248 = vmand %vm246, %vm244
      %v249 = vadd.s32 %v235, 16
      %v250 = vadd.s32 %v242, 16
      %v251 = vsel %vm247, %v249, %v235
      %v252 = vsel %vm248, %v250, %v242
      %vm253 = vcmp.ge.s32.totalorder %v251, 1
      %vm254 = vcmp.ge.s32.totalorder %v252, 1
      %vm255 = vcmp.le.s32.totalorder %v251, 14
      %vm256 = vcmp.le.s32.totalorder %v252, 14
      %v257 = vld [vmem:[%s1] sm:$0xf]
      %v258 = vld [vmem:[%s2] sm:$0xff]
      %v259 = vld [vmem:[%s3] sm:$0xf]
      %v260 = vld [vmem:[%s4] sm:$0xff]
      %v261 = vld [vmem:[%s219] sm:$0xff]
      %263 = vst [vmem:[#allocation1] ss:$2 sm:$0xff] %v261
      %v264 = vld.sshfl [vmem:[#allocation1] sm:$0xff pattern:$0x75316420]
      %v265 = vld.sshfl [vmem:[#allocation1 + $0x8] sm:$0xff pattern:$0x75316420]
      %266 = vrot.lane.b32.xlu0 %v264, 17
      %v267 = vpop.permute.xlu0 %266
      %268 = vrot.lane.b32.xlu0 %v265, 17
      %v269 = vpop.permute.xlu0 %268
      %vm270 = vcmask 138240
      %v271 = vsel %vm270, %v267, %v269
      %v275 = vsel %vm270, 0.0, %v267
      %v276 = vsel %vm270, %v269, 0.0
      %v277 = vsel %vm253, 1, 0
      %v278 = vsel %vm254, 1, 0
      %vm279 = vcmp.eq.s32.totalorder %v277, 1
      %vm280 = vcmp.eq.s32.totalorder %v278, 1
      %v281 = vsel %vm279, %v275, 0.0
      %v282 = vsel %vm280, %v271, 0.0
      %v283 = vsel %vm255, 1, 0
      %v284 = vsel %vm256, 1, 0
      %vm285 = vcmp.eq.s32.totalorder %v283, 1
      %vm286 = vcmp.eq.s32.totalorder %v284, 1
      %289 = vrot.lane.b32.xlu0 %v275, 126
      %v290 = vpop.permute.xlu0 %289
      %291 = vrot.lane.b32.xlu0 %v271, 126
      %v292 = vpop.permute.xlu0 %291
      %293 = vrot.lane.b32.xlu0 %v276, 126
      %v294 = vpop.permute.xlu0 %293
      %vm295 = vcmask 1031168
      %v296 = vsel %vm295, %v290, %v292
      %v297 = vsel %vm295, %v292, %v294
      %v300 = vsel %vm285, %v296, 0.0
      %v301 = vsel %vm286, %v297, 0.0
      %302 = vrot.lane.b32.xlu0 %v275, 112
      %v303 = vpop.permute.xlu0 %302
      %304 = vrot.lane.b32.xlu0 %v271, 112
      %v305 = vpop.permute.xlu0 %304
      %306 = vrot.lane.b32.xlu0 %v276, 112
      %v307 = vpop.permute.xlu0 %306
      %vm308 = vcmask 916480
      %v309 = vsel %vm308, %v303, %v305
      %v310 = vsel %vm308, %v305, %v307
      %v313 = vsel %vm279, %v309, 0.0
      %v314 = vsel %vm280, %v310, 0.0
      %315 = vrot.lane.b32.xlu0 %v275, 110
      %v316 = vpop.permute.xlu0 %315
      %317 = vrot.lane.b32.xlu0 %v271, 110
      %v318 = vpop.permute.xlu0 %317
      %319 = vrot.lane.b32.xlu0 %v276, 110
      %v320 = vpop.permute.xlu0 %319
      %vm321 = vcmask 900096
      %v322 = vsel %vm321, %v316, %v318
      %v323 = vsel %vm321, %v318, %v320
      %v326 = vsel %vm285, %v322, 0.0
      %v327 = vsel %vm286, %v323, 0.0
      %328 = vrot.lane.b32.xlu0 %v275, 96
      %v329 = vpop.permute.xlu0 %328
      %330 = vrot.lane.b32.xlu0 %v271, 96
      %v331 = vpop.permute.xlu0 %330
      %332 = vrot.lane.b32.xlu0 %v276, 96
      %v333 = vpop.permute.xlu0 %332
      %vm334 = vcmask 785408
      %v335 = vsel %vm334, %v329, %v331
      %v336 = vsel %vm334, %v331, %v333
      %v339 = vsel %vm279, %v335, 0.0
      %v340 = vsel %vm280, %v336, 0.0
      %341 = vrot.lane.b32.xlu0 %v275, 94
      %v342 = vpop.permute.xlu0 %341
      %343 = vrot.lane.b32.xlu0 %v271, 94
      %v344 = vpop.permute.xlu0 %343
      %345 = vrot.lane.b32.xlu0 %v276, 94
      %v346 = vpop.permute.xlu0 %345
      %vm347 = vcmask 769024
      %v348 = vsel %vm347, %v342, %v344
      %v349 = vsel %vm347, %v344, %v346
      %v352 = vsel %vm285, %v348, 0.0
      %v353 = vsel %vm286, %v349, 0.0
      %v354 = vrot.slane %v275, 4
      %v355 = vrot.slane %v271, 4
      %v356 = vrot.slane %v276, 4
      %357 = vrot.lane.b32.xlu0 %v354, 127
      %v358 = vpop.permute.xlu0 %357
      %359 = vrot.lane.b32.xlu0 %v355, 127
      %v360 = vpop.permute.xlu0 %359
      %361 = vrot.lane.b32.xlu0 %v356, 127
      %v362 = vpop.permute.xlu0 %361
      %vm363 = vcmask 1039360
      %v364 = vsel %vm363, %v358, %v360
      %v365 = vsel %vm363, %v360, %v362
      %v370 = vrot.slane %v313, 4
      %v371 = vrot.slane %v314, 4
      %374 = vrot.lane.b32.xlu0 %v275, 111
      %v375 = vpop.permute.xlu0 %374
      %376 = vrot.lane.b32.xlu0 %v271, 111
      %v377 = vpop.permute.xlu0 %376
      %378 = vrot.lane.b32.xlu0 %v276, 111
      %v379 = vpop.permute.xlu0 %378
      %vm380 = vcmask 908288
      %v381 = vsel %vm380, %v375, %v377
      %v382 = vsel %vm380, %v377, %v379
      %v387 = vrot.slane %v326, 4
      %v388 = vrot.slane %v327, 4
      %391 = vrot.lane.b32.xlu0 %v354, 95
      %v392 = vpop.permute.xlu0 %391
      %393 = vrot.lane.b32.xlu0 %v355, 95
      %v394 = vpop.permute.xlu0 %393
      %395 = vrot.lane.b32.xlu0 %v356, 95
      %v396 = vpop.permute.xlu0 %395
      %vm397 = vcmask 777216
      %v398 = vsel %vm397, %v392, %v394
      %v399 = vsel %vm397, %v394, %v396
      %vm402 = vcmask 1043456
      %v403 = vsel %vm402, %v281, %v364
      %v404 = vsel %vm402, %v282, %v365
      %v405 = vsel %vm402, %v300, %v370
      %v406 = vsel %vm402, %v301, %v371
      %v407 = vsel %vm402, %v381, %v387
      %v408 = vsel %vm402, %v382, %v388
      %v409 = vsel %vm402, %v339, %v398
      %v410 = vsel %vm402, %v340, %v399
      %v411 = vpack.c.bf16 %v405, %v403
      %v412 = vpack.c.bf16 %v406, %v404
      %v413 = vpack.c.bf16 %v409, %v407
      %v414 = vpack.c.bf16 %v410, %v408
      %v415 = vpack.c.bf16 %v352, %v352
      %v416 = vpack.c.bf16 %v353, %v353
      %418 = vset.pattern.permute.xlu0 0
      %419 = vperm.xlu0 %418, %v258
      %v420 = vpop.permute.xlu0 %419
      %vm422 = vcmask 293888
      %v424 = vsel %vm422, %v257, 0
      %vm426 = vcmask 1041408
      %v428 = vsel %vm426, %v415, 0
      %v431 = vsel %vm426, %v416, 0
      %433 = vmatpush.bf16.msra.mxu0 0
      %434 = vmatpush.bf16.msra.mxu0 0
      %435 = vmatpush.bf16.msra.mxu0 0
      %436 = vmatpush.bf16.msra.mxu0 0
      %437 = vmatpush.bf16.msra.mxu0 0
      %438 = vmatpush.bf16.msra.mxu0 %v428
      %439 = vmatpush.bf16.msra.mxu0 %v413
      %440 = vmatpush.bf16.msra.mxu0 %v411
      %441 = vmatmul.bf16.gmra.mxu0 %v424
      %v442 = vpop.f32.mrf.mxu0
      %v443 = vadd.f32 %v420, %v442
      %v444 = vpop.f32.mrf.mxu0
      %445 = vdwg.mxu0
      %446 = vmatpush.bf16.msra.mxu0 0
      %447 = vmatpush.bf16.msra.mxu0 0
      %448 = vmatpush.bf16.msra.mxu0 0
      %449 = vmatpush.bf16.msra.mxu0 0
      %450 = vmatpush.bf16.msra.mxu0 0
      %451 = vmatpush.bf16.msra.mxu0 %v431
      %452 = vmatpush.bf16.msra.mxu0 %v414
      %453 = vmatpush.bf16.msra.mxu0 %v412
      %454 = vmatmul.bf16.gmra.mxu0 %v424
      %v455 = vpop.f32.mrf.mxu0
      %v456 = vadd.f32 %v420, %v455
      %v457 = vpop.f32.mrf.mxu0
      %458 = vdwg.mxu0
      %v459 = vmax.f32 %v443, 0.0
      %v460 = vmax.f32 %v456, 0.0
      %463 = vrot.lane.b32.xlu0 %v459, 17
      %v464 = vpop.permute.xlu0 %463
      %465 = vrot.lane.b32.xlu0 %v460, 17
      %v466 = vpop.permute.xlu0 %465
      %v467 = vsel %vm270, %v464, %v466
      %v471 = vsel %vm270, 0.0, %v464
      %v472 = vsel %vm270, %v466, 0.0
      %v473 = vsel %vm279, %v471, 0.0
      %v474 = vsel %vm280, %v467, 0.0
      %477 = vrot.lane.b32.xlu0 %v471, 126
      %v478 = vpop.permute.xlu0 %477
      %479 = vrot.lane.b32.xlu0 %v467, 126
      %v480 = vpop.permute.xlu0 %479
      %481 = vrot.lane.b32.xlu0 %v472, 126
      %v482 = vpop.permute.xlu0 %481
      %v483 = vsel %vm295, %v478, %v480
      %v484 = vsel %vm295, %v480, %v482
      %v487 = vsel %vm285, %v483, 0.0
      %v488 = vsel %vm286, %v484, 0.0
      %489 = vrot.lane.b32.xlu0 %v471, 112
      %v490 = vpop.permute.xlu0 %489
      %491 = vrot.lane.b32.xlu0 %v467, 112
      %v492 = vpop.permute.xlu0 %491
      %493 = vrot.lane.b32.xlu0 %v472, 112
      %v494 = vpop.permute.xlu0 %493
      %v495 = vsel %vm308, %v490, %v492
      %v496 = vsel %vm308, %v492, %v494
      %v499 = vsel %vm279, %v495, 0.0
      %v500 = vsel %vm280, %v496, 0.0
      %501 = vrot.lane.b32.xlu0 %v471, 110
      %v502 = vpop.permute.xlu0 %501
      %503 = vrot.lane.b32.xlu0 %v467, 110
      %v504 = vpop.permute.xlu0 %503
      %505 = vrot.lane.b32.xlu0 %v472, 110
      %v506 = vpop.permute.xlu0 %505
      %v507 = vsel %vm321, %v502, %v504
      %v508 = vsel %vm321, %v504, %v506
      %v511 = vsel %vm285, %v507, 0.0
      %v512 = vsel %vm286, %v508, 0.0
      %513 = vrot.lane.b32.xlu0 %v471, 96
      %v514 = vpop.permute.xlu0 %513
      %515 = vrot.lane.b32.xlu0 %v467, 96
      %v516 = vpop.permute.xlu0 %515
      %517 = vrot.lane.b32.xlu0 %v472, 96
      %v518 = vpop.permute.xlu0 %517
      %v519 = vsel %vm334, %v514, %v516
      %v520 = vsel %vm334, %v516, %v518
      %v523 = vsel %vm279, %v519, 0.0
      %v524 = vsel %vm280, %v520, 0.0
      %525 = vrot.lane.b32.xlu0 %v471, 94
      %v526 = vpop.permute.xlu0 %525
      %527 = vrot.lane.b32.xlu0 %v467, 94
      %v528 = vpop.permute.xlu0 %527
      %529 = vrot.lane.b32.xlu0 %v472, 94
      %v530 = vpop.permute.xlu0 %529
      %v531 = vsel %vm347, %v526, %v528
      %v532 = vsel %vm347, %v528, %v530
      %v535 = vsel %vm285, %v531, 0.0
      %v536 = vsel %vm286, %v532, 0.0
      %537 = vrot.lane.b32.xlu0 %v471, 127
      %v538 = vpop.permute.xlu0 %537
      %539 = vrot.lane.b32.xlu0 %v467, 127
      %v540 = vpop.permute.xlu0 %539
      %541 = vrot.lane.b32.xlu0 %v472, 127
      %v542 = vpop.permute.xlu0 %541
      %v543 = vsel %vm363, %v538, %v540
      %v544 = vsel %vm363, %v540, %v542
      %547 = vrot.lane.b32.xlu0 %v471, 111
      %v548 = vpop.permute.xlu0 %547
      %549 = vrot.lane.b32.xlu0 %v467, 111
      %v550 = vpop.permute.xlu0 %549
      %551 = vrot.lane.b32.xlu0 %v472, 111
      %v552 = vpop.permute.xlu0 %551
      %v553 = vsel %vm380, %v548, %v550
      %v554 = vsel %vm380, %v550, %v552
      %557 = vrot.lane.b32.xlu0 %v471, 95
      %v558 = vpop.permute.xlu0 %557
      %559 = vrot.lane.b32.xlu0 %v467, 95
      %v560 = vpop.permute.xlu0 %559
      %561 = vrot.lane.b32.xlu0 %v472, 95
      %v562 = vpop.permute.xlu0 %561
      %v563 = vsel %vm397, %v558, %v560
      %v564 = vsel %vm397, %v560, %v562
      %v567 = vpack.c.bf16 %v543, %v473
      %v568 = vpack.c.bf16 %v544, %v474
      %v569 = vpack.c.bf16 %v499, %v487
      %v570 = vpack.c.bf16 %v500, %v488
      %v571 = vpack.c.bf16 %v511, %v553
      %v572 = vpack.c.bf16 %v512, %v554
      %v573 = vpack.c.bf16 %v563, %v523
      %v574 = vpack.c.bf16 %v564, %v524
      %v575 = vpack.c.bf16 %v535, %v535
      %v576 = vpack.c.bf16 %v536, %v536
      %578 = vset.pattern.permute.xlu0 0
      %579 = vperm.xlu0 %578, %v260
      %v580 = vpop.permute.xlu0 %579
      %vm582 = vcmask 588800
      %v584 = vsel %vm582, %v259, 0
      %v587 = vsel %vm402, %v575, 0
      %v590 = vsel %vm402, %v576, 0
      %592 = vmatpush.bf16.msra.mxu0 0
      %593 = vmatpush.bf16.msra.mxu0 0
      %594 = vmatpush.bf16.msra.mxu0 0
      %595 = vmatpush.bf16.msra.mxu0 %v587
      %596 = vmatpush.bf16.msra.mxu0 %v573
      %597 = vmatpush.bf16.msra.mxu0 %v571
      %598 = vmatpush.bf16.msra.mxu0 %v569
      %599 = vmatpush.bf16.msra.mxu0 %v567
      %600 = vmatmul.bf16.gmra.mxu0 %v584
      %v601 = vpop.f32.mrf.mxu0
      %v602 = vadd.f32 %v580, %v601
      %v603 = vpop.f32.mrf.mxu0
      %604 = vdwg.mxu0
      %605 = vmatpush.bf16.msra.mxu0 0
      %606 = vmatpush.bf16.msra.mxu0 0
      %607 = vmatpush.bf16.msra.mxu0 0
      %608 = vmatpush.bf16.msra.mxu0 %v590
      %609 = vmatpush.bf16.msra.mxu0 %v574
      %610 = vmatpush.bf16.msra.mxu0 %v572
      %611 = vmatpush.bf16.msra.mxu0 %v570
      %612 = vmatpush.bf16.msra.mxu0 %v568
      %613 = vmatmul.bf16.gmra.mxu0 %v584
      %v614 = vpop.f32.mrf.mxu0
      %v615 = vadd.f32 %v580, %v614
      %v616 = vpop.f32.mrf.mxu0
      %617 = vdwg.mxu0
      %v618 = vmax.f32 %v602, 0.0
      %v619 = vmax.f32 %v615, 0.0
      %620 = vst [vmem:[%s224] sm:$0xff] %v618
      %621 = vst [vmem:[%s224 + $0x8] sm:$0xff] %v619
      %p622 = scmp.lt.s32.totalorder %s16, 1
      %s623 = scalar_select %p622, %s16, 1
      %s624 = smul.addr %s623, 2
      %s625 = smul.addr %s624, 8
      %s626 = scalar_lea.vmem %s5, %s625
      // Predicated region
      $region41: #{conv_series_forward.1} parent=39 // pred_check
        %p627 = pneg %p144
      $region42: #{conv_series_forward.1} parent=39 // pred_check_branch
        %629 = sbr.rel (%p627) target = $region44
      $region43: #{conv_series_forward.1} parent=39 // pred_region
        _
      $region44: #{conv_series_forward.1} parent=39 // pred_fallthru
        _
    $region40: #{conv_series_forward.1} parent=5 // pred_fallthru
      _
    %p630 = scmp.le.s32.totalorder 2, %s11
    // Predicated region
    $region45: #{conv_series_forward.1} parent=5 // pred_check
      %p631 = pneg %p630
    $region46: #{conv_series_forward.1} parent=5 // pred_check_branch
      %633 = sbr.rel (%p631) target = $region48
    $region47: #{conv_series_forward.1} parent=5 // pred_region
      %s634 = ssub.s32 %s11, 2
      // Predicated region
      $region49: #{conv_series_forward.1} parent=47 // pred_check
        %p635 = pneg %p150
      $region50: #{conv_series_forward.1} parent=47 // pred_check_branch
        %637 = sbr.rel (%p635) target = $region52
      $region51: #{conv_series_forward.1} parent=47 // pred_region
        %p638 = scmp.lt.s32.totalorder %s17, 1
        %s639 = scalar_select %p638, %s17, 1
        %s640 = smul.addr %s639, 2
        %s641 = smul.addr %s640, 8
        %s642 = scalar_lea.vmem %s5, %s641
      $region52: #{conv_series_forward.1} parent=47 // pred_fallthru
        _
    $region48: #{conv_series_forward.1} parent=5 // pred_fallthru
      _
  $region6: #{conv_series_forward.1} parent=0 // loop_footer
    %s15 = sadd.s32 1, %s11
  $region7: #{conv_series_forward.1} parent=0 // loop_footer_branch
    %10 = sbr.rel target = $region3
  $region8: #{conv_series_forward.1} parent=0 // loop_exit
    _

</llo_original>
